<compile_context>
chip_gen: v6e
topology: v6e:2x2x1
jax: 0.10.0
libtpu: 0.0.40
codegen_flags: <defaults>
</compile_context>

<pallas_src>
import jax
import jax.numpy as jnp
from jax import lax
from jax.experimental import pallas as pl
from jax.experimental.pallas import tpu as pltpu


def _rk4_kernel(x0_ref, uproj_ref, dt_ref, wx_ref, out_ref, state_ref):
    """Grid = (batch_tiles, time_chunks).  One invocation integrates T steps for
    one batch tile; the carried state lives in VMEM scratch *across* chunks but
    is held in registers (loop-carried value) *within* a chunk."""
    c = pl.program_id(1)                      # time-chunk index (inner, sequential)
    T = uproj_ref.shape[0]

    wx = wx_ref[...]                          # hoist weight load out of the time loop
    # TODO(synk): for larger S, stage Wx in the MXU weight registers for the whole
    # chunk (pltpu.matmul_push_rhs / matmul_acc_lhs / matmul_pop) so only the LHS
    # push + result pop sits on the per-step serial chain; for S <= ~32 on v5e a
    # VPU broadcast-MAC formulation may beat the tiny MXU matmul — profile both.

    def dyn(x, cterm):
        # f(x, u) = tanh(x @ Wx + (u @ Wu + b)); the state-independent u-projection
        # `cterm` was hoisted into one large batched matmul in the wrapper.
        return jnp.tanh(jnp.dot(x, wx, preferred_element_type=jnp.float32) + cterm)

    # ---- peeled step t == 0 of this chunk ----
    cterm0 = uproj_ref[0]                     # (TB, S)
    dt0 = dt_ref[0]                           # (TB, 1) -> lane-broadcast below

    @pl.when(c == 0)
    def _():
        # Global step 0: the only true RK4 step in the reference.
        x = x0_ref[...]
        half_dt = 0.5 * dt0
        sixth_dt = dt0 * (1.0 / 6.0)          # constant multiply, no vector divide
        k1 = dyn(x, cterm0)
        k2 = dyn(x + half_dt * k1, cterm0)
        k3 = dyn(x + half_dt * k2, cterm0)
        k4 = dyn(x + dt0 * k3, cterm0)
        state_ref[...] = x + sixth_dt * (k1 + 2.0 * k2 + 2.0 * k3 + k4)

    @pl.when(c > 0)
    def _():
        # Steps i >= 1: all four stages equal -> forward Euler.  (Few-ULP
        # difference vs. computing (6k)/6 explicitly; inside 1e-5 tolerance.)
        x = state_ref[...]
        state_ref[...] = x + dt0 * dyn(x, cterm0)

    x = state_ref[...]
    out_ref[0] = x.astype(out_ref.dtype)

    # ---- steps 1 .. T-1: Euler recurrence carried in registers ----
    def body(t, x_carry):
        x_new = x_carry + dt_ref[t] * dyn(x_carry, uproj_ref[t])
        out_ref[t] = x_new.astype(out_ref.dtype)
        return x_new

    x_final = lax.fori_loop(1, T, body, x, unroll=max(1, min(8, T - 1)))
    state_ref[...] = x_final                  # carried to the next chunk (1 store/chunk)


def rk4_forward(initial_state, control_inputs, wx, wu, b,
                time_deltas=None, timestep=0.1, chunk=None, batch_tile=None):
    """initial_state: (B, S); control_inputs: (B, L, I); time_deltas: (B, L) or None.
    Returns integrated states of shape (B, L, S)."""
    B, S = initial_state.shape
    _, L, I = control_inputs.shape
    if time_deltas is None:
        time_deltas = jnp.full((B, L), timestep, dtype=jnp.float32)

    # Hoist the state-independent control projection out of the serial recurrence:
    # one large, well-utilized matmul in plain XLA instead of per-step tiny pushes.
    uproj = jnp.einsum("bli,is->bls",
                       control_inputs.astype(jnp.float32),
                       wu.astype(jnp.float32))
    uproj = uproj + b.astype(jnp.float32).reshape(1, 1, S)      # explicit bias shape
    uproj_tm = jnp.transpose(uproj, (1, 0, 2))                   # (L, B, S)

    # dt stays (L, B, 1): no redundant (L,B,S) slab; broadcast happens in-kernel.
    dt_tm = jnp.transpose(time_deltas.astype(jnp.float32), (1, 0))[:, :, None]

    # Batch tiling: parallel grid axis (second TensorCore on v7x for big batches).
    TB = B if batch_tile is None else batch_tile
    assert B % TB == 0 and (TB == B or TB % 8 == 0), \
        "batch tile must equal B or be a multiple of 8"
    num_btiles = B // TB

    # VMEM-aware time chunk: ~32 MiB budget for double-buffered uproj/out/dt chunks
    # — safe on every generation (v7x has only 64 MiB physical VMEM).
    if chunk is not None:
        T = chunk
    else:
        bytes_per_step = 2 * (2 * TB * S * 4 + TB * 4)           # 2x double-buffer
        T = int(max(1, min(L, (32 * 1024 * 1024) // max(bytes_per_step, 1), 256)))

    Lp = ((L + T - 1) // T) * T
    if Lp != L:
        pad = Lp - L
        # Padded steps (dt = 0, uproj = 0) leave the state unchanged; their
        # outputs are sliced off below, so correctness is unaffected.
        uproj_tm = jnp.pad(uproj_tm, ((0, pad), (0, 0), (0, 0)))
        dt_tm = jnp.pad(dt_tm, ((0, pad), (0, 0), (0, 0)))
    num_chunks = Lp // T

    out = pl.pallas_call(
        _rk4_kernel,
        out_shape=jax.ShapeDtypeStruct((Lp, B, S), jnp.float32),
        grid_spec=pltpu.PrefetchScalarGridSpec(
            num_scalar_prefetch=0,
            grid=(num_btiles, num_chunks),
            in_specs=[
                pl.BlockSpec((TB, S), lambda bt, c: (bt, 0)),          # initial state
                pl.BlockSpec((T, TB, S), lambda bt, c: (c, bt, 0)),    # u @ Wu + b
                pl.BlockSpec((T, TB, 1), lambda bt, c: (c, bt, 0)),    # dt (L,B,1)
                pl.BlockSpec((S, S), lambda bt, c: (0, 0)),            # Wx
            ],
            out_specs=pl.BlockSpec((T, TB, S), lambda bt, c: (c, bt, 0)),
            scratch_shapes=[pltpu.VMEM((TB, S), jnp.float32)],         # carried state
        ),
        compiler_params=pltpu.CompilerParams(
            dimension_semantics=("parallel", "arbitrary"),
            vmem_limit_bytes=48 * 1024 * 1024,
        ),
    )(initial_state.astype(jnp.float32), uproj_tm, dt_tm, wx.astype(jnp.float32))

    out = out[:L]
    # TODO(synk): for production shapes, pad S to a multiple of 128 (lane-dense
    # stores / real MXU utilization); `include_initial_state=True` and the
    # unbatched (1-D state) mode are trivial wrapper glue around the same kernel.
    return jnp.transpose(out, (1, 0, 2))      # (B, L, S)


def rk4_reference(initial_state, control_inputs, wx, wu, b,
                  time_deltas=None, timestep=0.1):
    """Pure-JAX reference mirroring the PyTorch control flow exactly."""
    B, L, I = control_inputs.shape
    if time_deltas is None:
        time_deltas = jnp.full((B, L), timestep, dtype=jnp.float32)

    def dyn(x, u):
        return jnp.tanh(x @ wx + u @ wu + b)

    x = initial_state.astype(jnp.float32)
    outs = []
    for i in range(L):
        u = control_inputs[:, i].astype(jnp.float32)
        dt = time_deltas[:, i][:, None].astype(jnp.float32)
        if i == 0:
            k1 = dyn(x, u)
            k2 = dyn(x + dt * k1 / 2, u)
            k3 = dyn(x + dt * k2 / 2, u)
            k4 = dyn(x + dt * k3, u)
        else:
            # Reference evaluates every stage at the previous integrated state.
            k1 = dyn(x, u); k2 = dyn(x, u); k3 = dyn(x, u); k4 = dyn(x, u)
        x = x + dt * (k1 + 2 * k2 + 2 * k3 + k4) / 6
        outs.append(x)
    return jnp.stack(outs, axis=1)


if __name__ == "__main__":
    B, L, S, I = 4, 8, 8, 4  # batch, seq length, state_dims, input_dims
    timestep = 0.1

    key = jax.random.PRNGKey(0)
    k_x0, k_u, k_wx, k_wu, k_b, k_dt = jax.random.split(key, 6)

    initial_state = jax.random.normal(k_x0, (B, S), dtype=jnp.float32)
    control_inputs = jax.random.normal(k_u, (B, L, I), dtype=jnp.float32)

    # Deterministic synthetic dynamics parameters (stand-in for PointParameterGroup).
    wx = 0.3 * jax.random.normal(k_wx, (S, S), dtype=jnp.float32)
    wu = 0.3 * jax.random.normal(k_wu, (I, S), dtype=jnp.float32)
    b = 0.1 * jax.random.normal(k_b, (1, S), dtype=jnp.float32)

    # --- default scalar timestep path ---
    out = rk4_forward(initial_state, control_inputs, wx, wu, b, timestep=timestep)
    out = jax.block_until_ready(out)
    ref = rk4_reference(initial_state, control_inputs, wx, wu, b, timestep=timestep)
    assert out.shape == (B, L, S)
    assert jnp.allclose(out, ref, atol=1e-5, rtol=1e-5), "mismatch vs reference (default dt)"

    # --- per-(B, L) time_deltas path ---
    time_deltas = 0.05 + 0.1 * jax.random.uniform(k_dt, (B, L), dtype=jnp.float32)
    out2 = rk4_forward(initial_state, control_inputs, wx, wu, b, time_deltas=time_deltas)
    out2 = jax.block_until_ready(out2)
    ref2 = rk4_reference(initial_state, control_inputs, wx, wu, b, time_deltas=time_deltas)
    assert jnp.allclose(out2, ref2, atol=1e-5, rtol=1e-5), "mismatch vs reference (time_deltas)"

    print("KERNEL_OK")
</pallas_src>

<mosaic_0001>
module attributes {stable_mosaic.version = 11 : i64} {
  func.func @_rk4_kernel(%arg0: i32, %arg1: i32, %arg2: memref<4x8xf32, #tpu.memory_space<vmem>>, %arg3: memref<8x4x8xf32, #tpu.memory_space<vmem>>, %arg4: memref<8x4x1xf32, #tpu.memory_space<vmem>>, %arg5: memref<8x8xf32, #tpu.memory_space<vmem>>, %arg6: memref<8x4x8xf32, #tpu.memory_space<vmem>>, %arg7: memref<4x8xf32, #tpu.memory_space<vmem>>) attributes {dimension_semantics = [#tpu.dimension_semantics<parallel>, #tpu.dimension_semantics<arbitrary>], iteration_bounds = array<i64: 1, 1>, scalar_prefetch = 0 : i64, scratch_operands = 1 : i64, tpu.core_type = #tpu.core_type<tc>, window_params = [{transform_indices = @transform_0, window_bounds = array<i64: 4, 8>}, {transform_indices = @transform_1, window_bounds = array<i64: 8, 4, 8>}, {transform_indices = @transform_2, window_bounds = array<i64: 8, 4, 1>}, {pipeline_mode = #tpu.pipeline_mode<synchronous>, transform_indices = @transform_3, window_bounds = array<i64: 8, 8>}, {transform_indices = @transform_4, window_bounds = array<i64: 8, 4, 8>}]} {
    %c0 = arith.constant 0 : index
    %c0_0 = arith.constant 0 : index
    %0 = vector.load %arg5[%c0, %c0_0] : memref<8x8xf32, #tpu.memory_space<vmem>>, vector<8x8xf32>
    %c0_1 = arith.constant 0 : index
    %c0_2 = arith.constant 0 : index
    %c0_3 = arith.constant 0 : index
    %1 = vector.load %arg3[%c0_1, %c0_2, %c0_3] : memref<8x4x8xf32, #tpu.memory_space<vmem>>, vector<1x4x8xf32>
    %2 = vector.shape_cast %1 : vector<1x4x8xf32> to vector<4x8xf32>
    %c0_4 = arith.constant 0 : index
    %c0_5 = arith.constant 0 : index
    %c0_6 = arith.constant 0 : index
    %3 = vector.load %arg4[%c0_4, %c0_5, %c0_6] : memref<8x4x1xf32, #tpu.memory_space<vmem>>, vector<1x4x1xf32>
    %4 = vector.shape_cast %3 : vector<1x4x1xf32> to vector<4x1xf32>
    %c0_i32 = arith.constant 0 : i32
    %5 = arith.cmpi eq, %arg1, %c0_i32 : i32
    %6 = arith.extui %5 : i1 to i32
    %c0_i32_7 = arith.constant 0 : i32
    %7 = arith.cmpi ne, %6, %c0_i32_7 : i32
    scf.if %7 {
      %c0_66 = arith.constant 0 : index
      %c0_67 = arith.constant 0 : index
      %128 = vector.load %arg2[%c0_66, %c0_67] : memref<4x8xf32, #tpu.memory_space<vmem>>, vector<4x8xf32>
      %cst_68 = arith.constant 5.000000e-01 : f32
      %129 = vector.broadcast %cst_68 : f32 to vector<4x1xf32>
      %130 = arith.mulf %129, %4 : vector<4x1xf32>
      %cst_69 = arith.constant 0.166666672 : f32
      %131 = vector.broadcast %cst_69 : f32 to vector<4x1xf32>
      %132 = arith.mulf %4, %131 : vector<4x1xf32>
      %cst_70 = arith.constant dense<0.000000e+00> : vector<4x8xf32>
      %133 = tpu.matmul %128, %0, %cst_70 {dimension_numbers = #tpu.dot_dimension_numbers<[1], [0], [0], [1], [0, 0, 1, 1], [], []>} : vector<4x8xf32>, vector<8x8xf32>, vector<4x8xf32> -> vector<4x8xf32>
      %134 = arith.addf %133, %2 : vector<4x8xf32>
      %135 = math.tanh %134 : vector<4x8xf32>
      %136 = vector.broadcast %130 : vector<4x1xf32> to vector<4x8xf32>
      %137 = arith.mulf %136, %135 : vector<4x8xf32>
      %138 = arith.addf %128, %137 : vector<4x8xf32>
      %cst_71 = arith.constant dense<0.000000e+00> : vector<4x8xf32>
      %139 = tpu.matmul %138, %0, %cst_71 {dimension_numbers = #tpu.dot_dimension_numbers<[1], [0], [0], [1], [0, 0, 1, 1], [], []>} : vector<4x8xf32>, vector<8x8xf32>, vector<4x8xf32> -> vector<4x8xf32>
      %140 = arith.addf %139, %2 : vector<4x8xf32>
      %141 = math.tanh %140 : vector<4x8xf32>
      %142 = vector.broadcast %130 : vector<4x1xf32> to vector<4x8xf32>
      %143 = arith.mulf %142, %141 : vector<4x8xf32>
      %144 = arith.addf %128, %143 : vector<4x8xf32>
      %cst_72 = arith.constant dense<0.000000e+00> : vector<4x8xf32>
      %145 = tpu.matmul %144, %0, %cst_72 {dimension_numbers = #tpu.dot_dimension_numbers<[1], [0], [0], [1], [0, 0, 1, 1], [], []>} : vector<4x8xf32>, vector<8x8xf32>, vector<4x8xf32> -> vector<4x8xf32>
      %146 = arith.addf %145, %2 : vector<4x8xf32>
      %147 = math.tanh %146 : vector<4x8xf32>
      %148 = vector.broadcast %4 : vector<4x1xf32> to vector<4x8xf32>
      %149 = arith.mulf %148, %147 : vector<4x8xf32>
      %150 = arith.addf %128, %149 : vector<4x8xf32>
      %cst_73 = arith.constant dense<0.000000e+00> : vector<4x8xf32>
      %151 = tpu.matmul %150, %0, %cst_73 {dimension_numbers = #tpu.dot_dimension_numbers<[1], [0], [0], [1], [0, 0, 1, 1], [], []>} : vector<4x8xf32>, vector<8x8xf32>, vector<4x8xf32> -> vector<4x8xf32>
      %152 = arith.addf %151, %2 : vector<4x8xf32>
      %153 = math.tanh %152 : vector<4x8xf32>
      %cst_74 = arith.constant 2.000000e+00 : f32
      %154 = vector.broadcast %cst_74 : f32 to vector<4x8xf32>
      %155 = arith.mulf %154, %141 : vector<4x8xf32>
      %156 = arith.addf %135, %155 : vector<4x8xf32>
      %cst_75 = arith.constant 2.000000e+00 : f32
      %157 = vector.broadcast %cst_75 : f32 to vector<4x8xf32>
      %158 = arith.mulf %157, %147 : vector<4x8xf32>
      %159 = arith.addf %156, %158 : vector<4x8xf32>
      %160 = arith.addf %159, %153 : vector<4x8xf32>
      %161 = vector.broadcast %132 : vector<4x1xf32> to vector<4x8xf32>
      %162 = arith.mulf %161, %160 : vector<4x8xf32>
      %163 = arith.addf %128, %162 : vector<4x8xf32>
      %c0_76 = arith.constant 0 : index
      %c0_77 = arith.constant 0 : index
      %164 = vector.load %arg7[%c0_76, %c0_77] : memref<4x8xf32, #tpu.memory_space<vmem>>, vector<4x8xf32>
      tpu.vector_store %arg7[%c0_76, %c0_77], %163 {strides = array<i32>} : memref<4x8xf32, #tpu.memory_space<vmem>>, vector<4x8xf32>,
    } else {
    }
    %c0_i32_8 = arith.constant 0 : i32
    %8 = arith.cmpi sgt, %arg1, %c0_i32_8 : i32
    %9 = arith.extui %8 : i1 to i32
    %c0_i32_9 = arith.constant 0 : i32
    %10 = arith.cmpi ne, %9, %c0_i32_9 : i32
    scf.if %10 {
      %c0_66 = arith.constant 0 : index
      %c0_67 = arith.constant 0 : index
      %128 = vector.load %arg7[%c0_66, %c0_67] : memref<4x8xf32, #tpu.memory_space<vmem>>, vector<4x8xf32>
      %cst_68 = arith.constant dense<0.000000e+00> : vector<4x8xf32>
      %129 = tpu.matmul %128, %0, %cst_68 {dimension_numbers = #tpu.dot_dimension_numbers<[1], [0], [0], [1], [0, 0, 1, 1], [], []>} : vector<4x8xf32>, vector<8x8xf32>, vector<4x8xf32> -> vector<4x8xf32>
      %130 = arith.addf %129, %2 : vector<4x8xf32>
      %131 = math.tanh %130 : vector<4x8xf32>
      %132 = vector.broadcast %4 : vector<4x1xf32> to vector<4x8xf32>
      %133 = arith.mulf %132, %131 : vector<4x8xf32>
      %134 = arith.addf %128, %133 : vector<4x8xf32>
      %c0_69 = arith.constant 0 : index
      %c0_70 = arith.constant 0 : index
      %135 = vector.load %arg7[%c0_69, %c0_70] : memref<4x8xf32, #tpu.memory_space<vmem>>, vector<4x8xf32>
      tpu.vector_store %arg7[%c0_69, %c0_70], %134 {strides = array<i32>} : memref<4x8xf32, #tpu.memory_space<vmem>>, vector<4x8xf32>,
    } else {
    }
    %c0_10 = arith.constant 0 : index
    %c0_11 = arith.constant 0 : index
    %11 = vector.load %arg7[%c0_10, %c0_11] : memref<4x8xf32, #tpu.memory_space<vmem>>, vector<4x8xf32>
    %c0_12 = arith.constant 0 : index
    %c0_13 = arith.constant 0 : index
    %c0_14 = arith.constant 0 : index
    %12 = vector.load %arg6[%c0_12, %c0_13, %c0_14] : memref<8x4x8xf32, #tpu.memory_space<vmem>>, vector<1x4x8xf32>
    %13 = vector.shape_cast %12 : vector<1x4x8xf32> to vector<4x8xf32>
    %14 = vector.shape_cast %11 : vector<4x8xf32> to vector<1x4x8xf32>
    tpu.vector_store %arg6[%c0_12, %c0_13, %c0_14], %14 {strides = array<i32>} : memref<8x4x8xf32, #tpu.memory_space<vmem>>, vector<1x4x8xf32>,
    %c1_i32 = arith.constant 1 : i32
    %15 = arith.index_cast %c1_i32 : i32 to index
    %c0_15 = arith.constant 0 : index
    %c0_16 = arith.constant 0 : index
    %16 = vector.load %arg4[%15, %c0_15, %c0_16] : memref<8x4x1xf32, #tpu.memory_space<vmem>>, vector<1x4x1xf32>
    %17 = vector.shape_cast %16 : vector<1x4x1xf32> to vector<4x1xf32>
    %18 = arith.index_cast %c1_i32 : i32 to index
    %c0_17 = arith.constant 0 : index
    %c0_18 = arith.constant 0 : index
    %19 = vector.load %arg3[%18, %c0_17, %c0_18] : memref<8x4x8xf32, #tpu.memory_space<vmem>>, vector<1x4x8xf32>
    %20 = vector.shape_cast %19 : vector<1x4x8xf32> to vector<4x8xf32>
    %cst = arith.constant dense<0.000000e+00> : vector<4x8xf32>
    %21 = tpu.matmul %11, %0, %cst {dimension_numbers = #tpu.dot_dimension_numbers<[1], [0], [0], [1], [0, 0, 1, 1], [], []>} : vector<4x8xf32>, vector<8x8xf32>, vector<4x8xf32> -> vector<4x8xf32>
    %22 = arith.addf %21, %20 : vector<4x8xf32>
    %23 = math.tanh %22 : vector<4x8xf32>
    %24 = vector.broadcast %17 : vector<4x1xf32> to vector<4x8xf32>
    %25 = arith.mulf %24, %23 : vector<4x8xf32>
    %26 = arith.addf %11, %25 : vector<4x8xf32>
    %27 = arith.index_cast %c1_i32 : i32 to index
    %c0_19 = arith.constant 0 : index
    %c0_20 = arith.constant 0 : index
    %28 = vector.load %arg6[%27, %c0_19, %c0_20] : memref<8x4x8xf32, #tpu.memory_space<vmem>>, vector<1x4x8xf32>
    %29 = vector.shape_cast %28 : vector<1x4x8xf32> to vector<4x8xf32>
    %30 = vector.shape_cast %26 : vector<4x8xf32> to vector<1x4x8xf32>
    tpu.vector_store %arg6[%27, %c0_19, %c0_20], %30 {strides = array<i32>} : memref<8x4x8xf32, #tpu.memory_space<vmem>>, vector<1x4x8xf32>,
    %c2_i32 = arith.constant 2 : i32
    %31 = arith.index_cast %c2_i32 : i32 to index
    %c0_21 = arith.constant 0 : index
    %c0_22 = arith.constant 0 : index
    %32 = vector.load %arg4[%31, %c0_21, %c0_22] : memref<8x4x1xf32, #tpu.memory_space<vmem>>, vector<1x4x1xf32>
    %33 = vector.shape_cast %32 : vector<1x4x1xf32> to vector<4x1xf32>
    %34 = arith.index_cast %c2_i32 : i32 to index
    %c0_23 = arith.constant 0 : index
    %c0_24 = arith.constant 0 : index
    %35 = vector.load %arg3[%34, %c0_23, %c0_24] : memref<8x4x8xf32, #tpu.memory_space<vmem>>, vector<1x4x8xf32>
    %36 = vector.shape_cast %35 : vector<1x4x8xf32> to vector<4x8xf32>
    %cst_25 = arith.constant dense<0.000000e+00> : vector<4x8xf32>
    %37 = tpu.matmul %26, %0, %cst_25 {dimension_numbers = #tpu.dot_dimension_numbers<[1], [0], [0], [1], [0, 0, 1, 1], [], []>} : vector<4x8xf32>, vector<8x8xf32>, vector<4x8xf32> -> vector<4x8xf32>
    %38 = arith.addf %37, %36 : vector<4x8xf32>
    %39 = math.tanh %38 : vector<4x8xf32>
    %40 = vector.broadcast %33 : vector<4x1xf32> to vector<4x8xf32>
    %41 = arith.mulf %40, %39 : vector<4x8xf32>
    %42 = arith.addf %26, %41 : vector<4x8xf32>
    %43 = arith.index_cast %c2_i32 : i32 to index
    %c0_26 = arith.constant 0 : index
    %c0_27 = arith.constant 0 : index
    %44 = vector.load %arg6[%43, %c0_26, %c0_27] : memref<8x4x8xf32, #tpu.memory_space<vmem>>, vector<1x4x8xf32>
    %45 = vector.shape_cast %44 : vector<1x4x8xf32> to vector<4x8xf32>
    %46 = vector.shape_cast %42 : vector<4x8xf32> to vector<1x4x8xf32>
    tpu.vector_store %arg6[%43, %c0_26, %c0_27], %46 {strides = array<i32>} : memref<8x4x8xf32, #tpu.memory_space<vmem>>, vector<1x4x8xf32>,
    %c3_i32 = arith.constant 3 : i32
    %47 = arith.index_cast %c3_i32 : i32 to index
    %c0_28 = arith.constant 0 : index
    %c0_29 = arith.constant 0 : index
    %48 = vector.load %arg4[%47, %c0_28, %c0_29] : memref<8x4x1xf32, #tpu.memory_space<vmem>>, vector<1x4x1xf32>
    %49 = vector.shape_cast %48 : vector<1x4x1xf32> to vector<4x1xf32>
    %50 = arith.index_cast %c3_i32 : i32 to index
    %c0_30 = arith.constant 0 : index
    %c0_31 = arith.constant 0 : index
    %51 = vector.load %arg3[%50, %c0_30, %c0_31] : memref<8x4x8xf32, #tpu.memory_space<vmem>>, vector<1x4x8xf32>
    %52 = vector.shape_cast %51 : vector<1x4x8xf32> to vector<4x8xf32>
    %cst_32 = arith.constant dense<0.000000e+00> : vector<4x8xf32>
    %53 = tpu.matmul %42, %0, %cst_32 {dimension_numbers = #tpu.dot_dimension_numbers<[1], [0], [0], [1], [0, 0, 1, 1], [], []>} : vector<4x8xf32>, vector<8x8xf32>, vector<4x8xf32> -> vector<4x8xf32>
    %54 = arith.addf %53, %52 : vector<4x8xf32>
    %55 = math.tanh %54 : vector<4x8xf32>
    %56 = vector.broadcast %49 : vector<4x1xf32> to vector<4x8xf32>
    %57 = arith.mulf %56, %55 : vector<4x8xf32>
    %58 = arith.addf %42, %57 : vector<4x8xf32>
    %59 = arith.index_cast %c3_i32 : i32 to index
    %c0_33 = arith.constant 0 : index
    %c0_34 = arith.constant 0 : index
    %60 = vector.load %arg6[%59, %c0_33, %c0_34] : memref<8x4x8xf32, #tpu.memory_space<vmem>>, vector<1x4x8xf32>
    %61 = vector.shape_cast %60 : vector<1x4x8xf32> to vector<4x8xf32>
    %62 = vector.shape_cast %58 : vector<4x8xf32> to vector<1x4x8xf32>
    tpu.vector_store %arg6[%59, %c0_33, %c0_34], %62 {strides = array<i32>} : memref<8x4x8xf32, #tpu.memory_space<vmem>>, vector<1x4x8xf32>,
    %c4_i32 = arith.constant 4 : i32
    %63 = arith.index_cast %c4_i32 : i32 to index
    %c0_35 = arith.constant 0 : index
    %c0_36 = arith.constant 0 : index
    %64 = vector.load %arg4[%63, %c0_35, %c0_36] : memref<8x4x1xf32, #tpu.memory_space<vmem>>, vector<1x4x1xf32>
    %65 = vector.shape_cast %64 : vector<1x4x1xf32> to vector<4x1xf32>
    %66 = arith.index_cast %c4_i32 : i32 to index
    %c0_37 = arith.constant 0 : index
    %c0_38 = arith.constant 0 : index
    %67 = vector.load %arg3[%66, %c0_37, %c0_38] : memref<8x4x8xf32, #tpu.memory_space<vmem>>, vector<1x4x8xf32>
    %68 = vector.shape_cast %67 : vector<1x4x8xf32> to vector<4x8xf32>
    %cst_39 = arith.constant dense<0.000000e+00> : vector<4x8xf32>
    %69 = tpu.matmul %58, %0, %cst_39 {dimension_numbers = #tpu.dot_dimension_numbers<[1], [0], [0], [1], [0, 0, 1, 1], [], []>} : vector<4x8xf32>, vector<8x8xf32>, vector<4x8xf32> -> vector<4x8xf32>
    %70 = arith.addf %69, %68 : vector<4x8xf32>
    %71 = math.tanh %70 : vector<4x8xf32>
    %72 = vector.broadcast %65 : vector<4x1xf32> to vector<4x8xf32>
    %73 = arith.mulf %72, %71 : vector<4x8xf32>
    %74 = arith.addf %58, %73 : vector<4x8xf32>
    %75 = arith.index_cast %c4_i32 : i32 to index
    %c0_40 = arith.constant 0 : index
    %c0_41 = arith.constant 0 : index
    %76 = vector.load %arg6[%75, %c0_40, %c0_41] : memref<8x4x8xf32, #tpu.memory_space<vmem>>, vector<1x4x8xf32>
    %77 = vector.shape_cast %76 : vector<1x4x8xf32> to vector<4x8xf32>
    %78 = vector.shape_cast %74 : vector<4x8xf32> to vector<1x4x8xf32>
    tpu.vector_store %arg6[%75, %c0_40, %c0_41], %78 {strides = array<i32>} : memref<8x4x8xf32, #tpu.memory_space<vmem>>, vector<1x4x8xf32>,
    %c5_i32 = arith.constant 5 : i32
    %79 = arith.index_cast %c5_i32 : i32 to index
    %c0_42 = arith.constant 0 : index
    %c0_43 = arith.constant 0 : index
    %80 = vector.load %arg4[%79, %c0_42, %c0_43] : memref<8x4x1xf32, #tpu.memory_space<vmem>>, vector<1x4x1xf32>
    %81 = vector.shape_cast %80 : vector<1x4x1xf32> to vector<4x1xf32>
    %82 = arith.index_cast %c5_i32 : i32 to index
    %c0_44 = arith.constant 0 : index
    %c0_45 = arith.constant 0 : index
    %83 = vector.load %arg3[%82, %c0_44, %c0_45] : memref<8x4x8xf32, #tpu.memory_space<vmem>>, vector<1x4x8xf32>
    %84 = vector.shape_cast %83 : vector<1x4x8xf32> to vector<4x8xf32>
    %cst_46 = arith.constant dense<0.000000e+00> : vector<4x8xf32>
    %85 = tpu.matmul %74, %0, %cst_46 {dimension_numbers = #tpu.dot_dimension_numbers<[1], [0], [0], [1], [0, 0, 1, 1], [], []>} : vector<4x8xf32>, vector<8x8xf32>, vector<4x8xf32> -> vector<4x8xf32>
    %86 = arith.addf %85, %84 : vector<4x8xf32>
    %87 = math.tanh %86 : vector<4x8xf32>
    %88 = vector.broadcast %81 : vector<4x1xf32> to vector<4x8xf32>
    %89 = arith.mulf %88, %87 : vector<4x8xf32>
    %90 = arith.addf %74, %89 : vector<4x8xf32>
    %91 = arith.index_cast %c5_i32 : i32 to index
    %c0_47 = arith.constant 0 : index
    %c0_48 = arith.constant 0 : index
    %92 = vector.load %arg6[%91, %c0_47, %c0_48] : memref<8x4x8xf32, #tpu.memory_space<vmem>>, vector<1x4x8xf32>
    %93 = vector.shape_cast %92 : vector<1x4x8xf32> to vector<4x8xf32>
    %94 = vector.shape_cast %90 : vector<4x8xf32> to vector<1x4x8xf32>
    tpu.vector_store %arg6[%91, %c0_47, %c0_48], %94 {strides = array<i32>} : memref<8x4x8xf32, #tpu.memory_space<vmem>>, vector<1x4x8xf32>,
    %c6_i32 = arith.constant 6 : i32
    %95 = arith.index_cast %c6_i32 : i32 to index
    %c0_49 = arith.constant 0 : index
    %c0_50 = arith.constant 0 : index
    %96 = vector.load %arg4[%95, %c0_49, %c0_50] : memref<8x4x1xf32, #tpu.memory_space<vmem>>, vector<1x4x1xf32>
    %97 = vector.shape_cast %96 : vector<1x4x1xf32> to vector<4x1xf32>
    %98 = arith.index_cast %c6_i32 : i32 to index
    %c0_51 = arith.constant 0 : index
    %c0_52 = arith.constant 0 : index
    %99 = vector.load %arg3[%98, %c0_51, %c0_52] : memref<8x4x8xf32, #tpu.memory_space<vmem>>, vector<1x4x8xf32>
    %100 = vector.shape_cast %99 : vector<1x4x8xf32> to vector<4x8xf32>
    %cst_53 = arith.constant dense<0.000000e+00> : vector<4x8xf32>
    %101 = tpu.matmul %90, %0, %cst_53 {dimension_numbers = #tpu.dot_dimension_numbers<[1], [0], [0], [1], [0, 0, 1, 1], [], []>} : vector<4x8xf32>, vector<8x8xf32>, vector<4x8xf32> -> vector<4x8xf32>
    %102 = arith.addf %101, %100 : vector<4x8xf32>
    %103 = math.tanh %102 : vector<4x8xf32>
    %104 = vector.broadcast %97 : vector<4x1xf32> to vector<4x8xf32>
    %105 = arith.mulf %104, %103 : vector<4x8xf32>
    %106 = arith.addf %90, %105 : vector<4x8xf32>
    %107 = arith.index_cast %c6_i32 : i32 to index
    %c0_54 = arith.constant 0 : index
    %c0_55 = arith.constant 0 : index
    %108 = vector.load %arg6[%107, %c0_54, %c0_55] : memref<8x4x8xf32, #tpu.memory_space<vmem>>, vector<1x4x8xf32>
    %109 = vector.shape_cast %108 : vector<1x4x8xf32> to vector<4x8xf32>
    %110 = vector.shape_cast %106 : vector<4x8xf32> to vector<1x4x8xf32>
    tpu.vector_store %arg6[%107, %c0_54, %c0_55], %110 {strides = array<i32>} : memref<8x4x8xf32, #tpu.memory_space<vmem>>, vector<1x4x8xf32>,
    %c7_i32 = arith.constant 7 : i32
    %111 = arith.index_cast %c7_i32 : i32 to index
    %c0_56 = arith.constant 0 : index
    %c0_57 = arith.constant 0 : index
    %112 = vector.load %arg4[%111, %c0_56, %c0_57] : memref<8x4x1xf32, #tpu.memory_space<vmem>>, vector<1x4x1xf32>
    %113 = vector.shape_cast %112 : vector<1x4x1xf32> to vector<4x1xf32>
    %114 = arith.index_cast %c7_i32 : i32 to index
    %c0_58 = arith.constant 0 : index
    %c0_59 = arith.constant 0 : index
    %115 = vector.load %arg3[%114, %c0_58, %c0_59] : memref<8x4x8xf32, #tpu.memory_space<vmem>>, vector<1x4x8xf32>
    %116 = vector.shape_cast %115 : vector<1x4x8xf32> to vector<4x8xf32>
    %cst_60 = arith.constant dense<0.000000e+00> : vector<4x8xf32>
    %117 = tpu.matmul %106, %0, %cst_60 {dimension_numbers = #tpu.dot_dimension_numbers<[1], [0], [0], [1], [0, 0, 1, 1], [], []>} : vector<4x8xf32>, vector<8x8xf32>, vector<4x8xf32> -> vector<4x8xf32>
    %118 = arith.addf %117, %116 : vector<4x8xf32>
    %119 = math.tanh %118 : vector<4x8xf32>
    %120 = vector.broadcast %113 : vector<4x1xf32> to vector<4x8xf32>
    %121 = arith.mulf %120, %119 : vector<4x8xf32>
    %122 = arith.addf %106, %121 : vector<4x8xf32>
    %123 = arith.index_cast %c7_i32 : i32 to index
    %c0_61 = arith.constant 0 : index
    %c0_62 = arith.constant 0 : index
    %124 = vector.load %arg6[%123, %c0_61, %c0_62] : memref<8x4x8xf32, #tpu.memory_space<vmem>>, vector<1x4x8xf32>
    %125 = vector.shape_cast %124 : vector<1x4x8xf32> to vector<4x8xf32>
    %126 = vector.shape_cast %122 : vector<4x8xf32> to vector<1x4x8xf32>
    tpu.vector_store %arg6[%123, %c0_61, %c0_62], %126 {strides = array<i32>} : memref<8x4x8xf32, #tpu.memory_space<vmem>>, vector<1x4x8xf32>,
    %c7_i32_63 = arith.constant 7 : i32
    %c0_64 = arith.constant 0 : index
    %c0_65 = arith.constant 0 : index
    %127 = vector.load %arg7[%c0_64, %c0_65] : memref<4x8xf32, #tpu.memory_space<vmem>>, vector<4x8xf32>
    tpu.vector_store %arg7[%c0_64, %c0_65], %122 {strides = array<i32>} : memref<4x8xf32, #tpu.memory_space<vmem>>, vector<4x8xf32>,
    return
  }
  func.func @transform_0(%arg0: i32, %arg1: i32) -> (i32, i32) {
    %c0_i32 = arith.constant 0 : i32
    %c0_i32_0 = arith.constant 0 : i32
    return %arg0, %c0_i32 : i32, i32
  }
  func.func @transform_1(%arg0: i32, %arg1: i32) -> (i32, i32, i32) {
    %c0_i32 = arith.constant 0 : i32
    %c0_i32_0 = arith.constant 0 : i32
    return %arg1, %arg0, %c0_i32 : i32, i32, i32
  }
  func.func @transform_2(%arg0: i32, %arg1: i32) -> (i32, i32, i32) {
    %c0_i32 = arith.constant 0 : i32
    %c0_i32_0 = arith.constant 0 : i32
    return %arg1, %arg0, %c0_i32 : i32, i32, i32
  }
  func.func @transform_3(%arg0: i32, %arg1: i32) -> (i32, i32) {
    %c0_i32 = arith.constant 0 : i32
    %c0_i32_0 = arith.constant 0 : i32
    %c0_i32_1 = arith.constant 0 : i32
    return %c0_i32, %c0_i32_0 : i32, i32
  }
  func.func @transform_4(%arg0: i32, %arg1: i32) -> (i32, i32, i32) {
    %c0_i32 = arith.constant 0 : i32
    %c0_i32_0 = arith.constant 0 : i32
    return %arg1, %arg0, %c0_i32 : i32, i32, i32
  }
}

</mosaic_0001>

<llo_original>
// kernel: tpu_custom_call.1
$region0: #{tpu_custom_call.1}
  #allocation0 [shape = 'u32[]', space=smem, size = 0x4, offset = 0x4, fixed_abs, tag = 'smem constant byte address 0x4 - core index']
  #allocation1 [shape = 'u32[144,128]{1,0:T(1,128)}', space=vmem, size = 0x12000, scoped, tag = 'internal scratch']
  #allocation2 [shape = 'f32[4,8]{1,0:T(4,128)}', space=vmem, size = 0x800, scoped, tag = 'scratch operand']
  %s0 = inlined_call_operand.hbm [shape: f32[4,8], index: 0, kind: input, shape index: {}]
  %s1 = inlined_call_operand.vmem [shape: f32[8,4,8], index: 1, kind: input, shape index: {}]
  %s2 = inlined_call_operand.vmem [shape: f32[8,4,1], index: 2, kind: input, shape index: {}]
  %s3 = inlined_call_operand.vmem [shape: f32[8,8], index: 3, kind: input, shape index: {}]
  %s4 = inlined_call_operand.hbm [shape: f32[8,4,8], index: 4, kind: output, shape index: {}]
  %s5 = sld [smem:[#allocation0]]
  $region38: #{tpu_custom_call.1} parent=0
    _
  %s7 = ssub.s32 1, %s5
  %s8 = scalar_select 0, %s7, %s5
  $region1: #{tpu_custom_call.1} parent=0
    #allocation3 [shape = 'u8[2048]{0}', space=vmem, size = 0x800, scoped, tag = 'input window, operand 0, single buffered']
    #allocation4 [shape = 's32[1]{0}', space=sflag, size = 0x4, scoped, tag = 'scoped memory for tpu_custom_call.1']
    #allocation5 [shape = 's32[1]{0}', space=sflag, size = 0x4, scoped, tag = 'scoped memory for tpu_custom_call.1']
    #allocation6 [shape = 'u8[16384]{0}', space=vmem, size = 0x4000, scoped, tag = 'output window, operand 0, single buffered']
    %9 = vsyncpa [#allocation4], 0
    %10 = vsyncpa [#allocation5], 0
    // Predicated region
    $region2: #{tpu_custom_call.1} parent=1 // pred_check
      _
    $region3: #{tpu_custom_call.1} parent=1 // pred_check_branch
      %12 = sbr.rel (0) target = $region5
    $region4: #{tpu_custom_call.1} parent=1 // pred_region
      %s14 = ssub.s32 64, 64
      %15 = vsyncadd [#allocation4], %s14
      %s17 = sshll.u32 [#allocation3], 4
      %s18 = int_to_ptr.vmem [resolvable:$true] %s17
      %20 = dma.hbm_to_vmem [thread:$0]  %s0, 64, %s18, [#allocation4]
    $region5: #{tpu_custom_call.1} parent=1 // pred_fallthru
      _
    // Predicated region
    $region6: #{tpu_custom_call.1} parent=1 // pred_check
      _
    $region7: #{tpu_custom_call.1} parent=1 // pred_check_branch
      %22 = sbr.rel (0) target = $region9
    $region8: #{tpu_custom_call.1} parent=1 // pred_region
      _
    $region9: #{tpu_custom_call.1} parent=1 // pred_fallthru
      _
    // Predicated region
    $region10: #{tpu_custom_call.1} parent=1 // pred_check
      _
    $region11: #{tpu_custom_call.1} parent=1 // pred_check_branch
      %24 = sbr.rel (0) target = $region13
    $region12: #{tpu_custom_call.1} parent=1 // pred_region
      _
    $region13: #{tpu_custom_call.1} parent=1 // pred_fallthru
      _
    // Predicated region
    $region14: #{tpu_custom_call.1} parent=1 // pred_check
      _
    $region15: #{tpu_custom_call.1} parent=1 // pred_check_branch
      %26 = sbr.rel (0) target = $region17
    $region16: #{tpu_custom_call.1} parent=1 // pred_region
      _
    $region17: #{tpu_custom_call.1} parent=1 // pred_fallthru
      _
    // Predicated region
    $region18: #{tpu_custom_call.1} parent=1 // pred_check
      _
    $region19: #{tpu_custom_call.1} parent=1 // pred_check_branch
      %28 = sbr.rel (0) target = $region21
    $region20: #{tpu_custom_call.1} parent=1 // pred_region
      %29 = dma.done [#allocation4], 64
    $region21: #{tpu_custom_call.1} parent=1 // pred_fallthru
      _
    %v30 = vld [vmem:[%s3] sm:$0xff]
    %v31 = vld [vmem:[%s1] sm:$0xf]
    %v32 = vld [vmem:[%s2] sm:$0xf]
    %p33 = scmp.eq.s32.totalorder 0, 0
    // Predicated region
    $region22: #{tpu_custom_call.1} parent=1 // pred_check
      %p34 = pneg %p33
    $region23: #{tpu_custom_call.1} parent=1 // pred_check_branch
      %36 = sbr.rel (%p34) target = $region25
    $region24: #{tpu_custom_call.1} parent=1 // pred_region
      %v37 = vld [vmem:[#allocation3] sm:$0xf]
      %v38 = vmul.f32 %v32, 0.5
      %v39 = vmul.f32 %v32, 0.16666667
      %vm40 = vcmask 64512
      %v42 = vsel %vm40, %v37, 0
      %44 = vmatprep.subr.mxu0 0.0
      %45 = vmatpush1.msra.mxu0 0.0
      %46 = vmatprep.subr.mxu0 0.0
      %47 = vmatpush1.msra.mxu0 0.0
      %48 = vmatprep.subr.mxu0 0.0
      %49 = vmatpush1.msra.mxu0 0.0
      %50 = vmatprep.subr.mxu0 0.0
      %51 = vmatpush1.msra.mxu0 0.0
      %52 = vmatprep.subr.mxu0 0.0
      %53 = vmatpush1.msra.mxu0 0.0
      %54 = vmatprep.subr.mxu0 0.0
      %55 = vmatpush1.msra.mxu0 0.0
      %56 = vmatprep.subr.mxu0 0.0
      %57 = vmatpush1.msra.mxu0 0.0
      %58 = vmatprep.subr.mxu0 0.0
      %59 = vmatpush1.msra.mxu0 0.0
      %60 = vmatprep.subr.mxu0 0.0
      %61 = vmatpush1.msra.mxu0 0.0
      %62 = vmatprep.subr.mxu0 0.0
      %63 = vmatpush1.msra.mxu0 0.0
      %64 = vmatprep.subr.mxu0 0.0
      %65 = vmatpush1.msra.mxu0 0.0
      %66 = vmatprep.subr.mxu0 0.0
      %67 = vmatpush1.msra.mxu0 0.0
      %68 = vmatprep.subr.mxu0 0.0
      %69 = vmatpush1.msra.mxu0 0.0
      %70 = vmatprep.subr.mxu0 0.0
      %71 = vmatpush1.msra.mxu0 0.0
      %72 = vmatprep.subr.mxu0 0.0
      %73 = vmatpush1.msra.mxu0 0.0
      %74 = vmatprep.subr.mxu0 0.0
      %75 = vmatpush1.msra.mxu0 %v30
      %76 = vmatprep.subr.mxu0 0.0
      %77 = vmatpush2.msra.mxu0 0.0
      %78 = vmatprep.subr.mxu0 0.0
      %79 = vmatpush2.msra.mxu0 0.0
      %80 = vmatprep.subr.mxu0 0.0
      %81 = vmatpush2.msra.mxu0 0.0
      %82 = vmatprep.subr.mxu0 0.0
      %83 = vmatpush2.msra.mxu0 0.0
      %84 = vmatprep.subr.mxu0 0.0
      %85 = vmatpush2.msra.mxu0 0.0
      %86 = vmatprep.subr.mxu0 0.0
      %87 = vmatpush2.msra.mxu0 0.0
      %88 = vmatprep.subr.mxu0 0.0
      %89 = vmatpush2.msra.mxu0 0.0
      %90 = vmatprep.subr.mxu0 0.0
      %91 = vmatpush2.msra.mxu0 0.0
      %92 = vmatprep.subr.mxu0 0.0
      %93 = vmatpush2.msra.mxu0 0.0
      %94 = vmatprep.subr.mxu0 0.0
      %95 = vmatpush2.msra.mxu0 0.0
      %96 = vmatprep.subr.mxu0 0.0
      %97 = vmatpush2.msra.mxu0 0.0
      %98 = vmatprep.subr.mxu0 0.0
      %99 = vmatpush2.msra.mxu0 0.0
      %100 = vmatprep.subr.mxu0 0.0
      %101 = vmatpush2.msra.mxu0 0.0
      %102 = vmatprep.subr.mxu0 0.0
      %103 = vmatpush2.msra.mxu0 0.0
      %104 = vmatprep.subr.mxu0 0.0
      %105 = vmatpush2.msra.mxu0 0.0
      %106 = vmatprep.subr.mxu0 0.0
      %107 = vmatpush2.msra.mxu0 0.0
      %108 = vmatprep.mubr.f32.mxu0 0.0
      %109 = vmatmul.mubr.f32.gmra.mxu0 %v42
      %v110 = vpop.f32.mrf.mxu0
      %v111 = vadd.f32 %v31, %v110
      %v112 = vpop.f32.mrf.mxu0
      %113 = vdwg.mxu0
      %v114 = vtanh.pop %v111
      %116 = vset.pattern.permute.xlu0 0
      %117 = vperm.xlu0 %116, %v38
      %v118 = vpop.permute.xlu0 %117
      %v120 = vmul.f32 %v118, %v114
      %v121 = vadd.f32 %v37, %v120
      %v123 = vsel %vm40, %v121, 0
      %125 = vmatprep.subr.mxu0 0.0
      %126 = vmatpush1.msra.mxu0 0.0
      %127 = vmatprep.subr.mxu0 0.0
      %128 = vmatpush1.msra.mxu0 0.0
      %129 = vmatprep.subr.mxu0 0.0
      %130 = vmatpush1.msra.mxu0 0.0
      %131 = vmatprep.subr.mxu0 0.0
      %132 = vmatpush1.msra.mxu0 0.0
      %133 = vmatprep.subr.mxu0 0.0
      %134 = vmatpush1.msra.mxu0 0.0
      %135 = vmatprep.subr.mxu0 0.0
      %136 = vmatpush1.msra.mxu0 0.0
      %137 = vmatprep.subr.mxu0 0.0
      %138 = vmatpush1.msra.mxu0 0.0
      %139 = vmatprep.subr.mxu0 0.0
      %140 = vmatpush1.msra.mxu0 0.0
      %141 = vmatprep.subr.mxu0 0.0
      %142 = vmatpush1.msra.mxu0 0.0
      %143 = vmatprep.subr.mxu0 0.0
      %144 = vmatpush1.msra.mxu0 0.0
      %145 = vmatprep.subr.mxu0 0.0
      %146 = vmatpush1.msra.mxu0 0.0
      %147 = vmatprep.subr.mxu0 0.0
      %148 = vmatpush1.msra.mxu0 0.0
      %149 = vmatprep.subr.mxu0 0.0
      %150 = vmatpush1.msra.mxu0 0.0
      %151 = vmatprep.subr.mxu0 0.0
      %152 = vmatpush1.msra.mxu0 0.0
      %153 = vmatprep.subr.mxu0 0.0
      %154 = vmatpush1.msra.mxu0 0.0
      %155 = vmatprep.subr.mxu0 0.0
      %156 = vmatpush1.msra.mxu0 %v30
      %157 = vmatprep.subr.mxu0 0.0
      %158 = vmatpush2.msra.mxu0 0.0
      %159 = vmatprep.subr.mxu0 0.0
      %160 = vmatpush2.msra.mxu0 0.0
      %161 = vmatprep.subr.mxu0 0.0
      %162 = vmatpush2.msra.mxu0 0.0
      %163 = vmatprep.subr.mxu0 0.0
      %164 = vmatpush2.msra.mxu0 0.0
      %165 = vmatprep.subr.mxu0 0.0
      %166 = vmatpush2.msra.mxu0 0.0
      %167 = vmatprep.subr.mxu0 0.0
      %168 = vmatpush2.msra.mxu0 0.0
      %169 = vmatprep.subr.mxu0 0.0
      %170 = vmatpush2.msra.mxu0 0.0
      %171 = vmatprep.subr.mxu0 0.0
      %172 = vmatpush2.msra.mxu0 0.0
      %173 = vmatprep.subr.mxu0 0.0
      %174 = vmatpush2.msra.mxu0 0.0
      %175 = vmatprep.subr.mxu0 0.0
      %176 = vmatpush2.msra.mxu0 0.0
      %177 = vmatprep.subr.mxu0 0.0
      %178 = vmatpush2.msra.mxu0 0.0
      %179 = vmatprep.subr.mxu0 0.0
      %180 = vmatpush2.msra.mxu0 0.0
      %181 = vmatprep.subr.mxu0 0.0
      %182 = vmatpush2.msra.mxu0 0.0
      %183 = vmatprep.subr.mxu0 0.0
      %184 = vmatpush2.msra.mxu0 0.0
      %185 = vmatprep.subr.mxu0 0.0
      %186 = vmatpush2.msra.mxu0 0.0
      %187 = vmatprep.subr.mxu0 0.0
      %188 = vmatpush2.msra.mxu0 0.0
      %189 = vmatprep.mubr.f32.mxu0 0.0
      %190 = vmatmul.mubr.f32.gmra.mxu0 %v123
      %v191 = vpop.f32.mrf.mxu0
      %v192 = vadd.f32 %v31, %v191
      %v193 = vpop.f32.mrf.mxu0
      %194 = vdwg.mxu0
      %v195 = vtanh.pop %v192
      %v196 = vmul.f32 %v118, %v195
      %v197 = vadd.f32 %v37, %v196
      %v199 = vsel %vm40, %v197, 0
      %201 = vmatprep.subr.mxu0 0.0
      %202 = vmatpush1.msra.mxu0 0.0
      %203 = vmatprep.subr.mxu0 0.0
      %204 = vmatpush1.msra.mxu0 0.0
      %205 = vmatprep.subr.mxu0 0.0
      %206 = vmatpush1.msra.mxu0 0.0
      %207 = vmatprep.subr.mxu0 0.0
      %208 = vmatpush1.msra.mxu0 0.0
      %209 = vmatprep.subr.mxu0 0.0
      %210 = vmatpush1.msra.mxu0 0.0
      %211 = vmatprep.subr.mxu0 0.0
      %212 = vmatpush1.msra.mxu0 0.0
      %213 = vmatprep.subr.mxu0 0.0
      %214 = vmatpush1.msra.mxu0 0.0
      %215 = vmatprep.subr.mxu0 0.0
      %216 = vmatpush1.msra.mxu0 0.0
      %217 = vmatprep.subr.mxu0 0.0
      %218 = vmatpush1.msra.mxu0 0.0
      %219 = vmatprep.subr.mxu0 0.0
      %220 = vmatpush1.msra.mxu0 0.0
      %221 = vmatprep.subr.mxu0 0.0
      %222 = vmatpush1.msra.mxu0 0.0
      %223 = vmatprep.subr.mxu0 0.0
      %224 = vmatpush1.msra.mxu0 0.0
      %225 = vmatprep.subr.mxu0 0.0
      %226 = vmatpush1.msra.mxu0 0.0
      %227 = vmatprep.subr.mxu0 0.0
      %228 = vmatpush1.msra.mxu0 0.0
      %229 = vmatprep.subr.mxu0 0.0
      %230 = vmatpush1.msra.mxu0 0.0
      %231 = vmatprep.subr.mxu0 0.0
      %232 = vmatpush1.msra.mxu0 %v30
      %233 = vmatprep.subr.mxu0 0.0
      %234 = vmatpush2.msra.mxu0 0.0
      %235 = vmatprep.subr.mxu0 0.0
      %236 = vmatpush2.msra.mxu0 0.0
      %237 = vmatprep.subr.mxu0 0.0
      %238 = vmatpush2.msra.mxu0 0.0
      %239 = vmatprep.subr.mxu0 0.0
      %240 = vmatpush2.msra.mxu0 0.0
      %241 = vmatprep.subr.mxu0 0.0
      %242 = vmatpush2.msra.mxu0 0.0
      %243 = vmatprep.subr.mxu0 0.0
      %244 = vmatpush2.msra.mxu0 0.0
      %245 = vmatprep.subr.mxu0 0.0
      %246 = vmatpush2.msra.mxu0 0.0
      %247 = vmatprep.subr.mxu0 0.0
      %248 = vmatpush2.msra.mxu0 0.0
      %249 = vmatprep.subr.mxu0 0.0
      %250 = vmatpush2.msra.mxu0 0.0
      %251 = vmatprep.subr.mxu0 0.0
      %252 = vmatpush2.msra.mxu0 0.0
      %253 = vmatprep.subr.mxu0 0.0
      %254 = vmatpush2.msra.mxu0 0.0
      %255 = vmatprep.subr.mxu0 0.0
      %256 = vmatpush2.msra.mxu0 0.0
      %257 = vmatprep.subr.mxu0 0.0
      %258 = vmatpush2.msra.mxu0 0.0
      %259 = vmatprep.subr.mxu0 0.0
      %260 = vmatpush2.msra.mxu0 0.0
      %261 = vmatprep.subr.mxu0 0.0
      %262 = vmatpush2.msra.mxu0 0.0
      %263 = vmatprep.subr.mxu0 0.0
      %264 = vmatpush2.msra.mxu0 0.0
      %265 = vmatprep.mubr.f32.mxu0 0.0
      %266 = vmatmul.mubr.f32.gmra.mxu0 %v199
      %v267 = vpop.f32.mrf.mxu0
      %v268 = vadd.f32 %v31, %v267
      %v269 = vpop.f32.mrf.mxu0
      %270 = vdwg.mxu0
      %v271 = vtanh.pop %v268
      %273 = vset.pattern.permute.xlu0 0
      %274 = vperm.xlu0 %273, %v32
      %v275 = vpop.permute.xlu0 %274
      %v277 = vmul.f32 %v275, %v271
      %v278 = vadd.f32 %v37, %v277
      %v280 = vsel %vm40, %v278, 0
      %282 = vmatprep.subr.mxu0 0.0
      %283 = vmatpush1.msra.mxu0 0.0
      %284 = vmatprep.subr.mxu0 0.0
      %285 = vmatpush1.msra.mxu0 0.0
      %286 = vmatprep.subr.mxu0 0.0
      %287 = vmatpush1.msra.mxu0 0.0
      %288 = vmatprep.subr.mxu0 0.0
      %289 = vmatpush1.msra.mxu0 0.0
      %290 = vmatprep.subr.mxu0 0.0
      %291 = vmatpush1.msra.mxu0 0.0
      %292 = vmatprep.subr.mxu0 0.0
      %293 = vmatpush1.msra.mxu0 0.0
      %294 = vmatprep.subr.mxu0 0.0
      %295 = vmatpush1.msra.mxu0 0.0
      %296 = vmatprep.subr.mxu0 0.0
      %297 = vmatpush1.msra.mxu0 0.0
      %298 = vmatprep.subr.mxu0 0.0
      %299 = vmatpush1.msra.mxu0 0.0
      %300 = vmatprep.subr.mxu0 0.0
      %301 = vmatpush1.msra.mxu0 0.0
      %302 = vmatprep.subr.mxu0 0.0
      %303 = vmatpush1.msra.mxu0 0.0
      %304 = vmatprep.subr.mxu0 0.0
      %305 = vmatpush1.msra.mxu0 0.0
      %306 = vmatprep.subr.mxu0 0.0
      %307 = vmatpush1.msra.mxu0 0.0
      %308 = vmatprep.subr.mxu0 0.0
      %309 = vmatpush1.msra.mxu0 0.0
      %310 = vmatprep.subr.mxu0 0.0
      %311 = vmatpush1.msra.mxu0 0.0
      %312 = vmatprep.subr.mxu0 0.0
      %313 = vmatpush1.msra.mxu0 %v30
      %314 = vmatprep.subr.mxu0 0.0
      %315 = vmatpush2.msra.mxu0 0.0
      %316 = vmatprep.subr.mxu0 0.0
      %317 = vmatpush2.msra.mxu0 0.0
      %318 = vmatprep.subr.mxu0 0.0
      %319 = vmatpush2.msra.mxu0 0.0
      %320 = vmatprep.subr.mxu0 0.0
      %321 = vmatpush2.msra.mxu0 0.0
      %322 = vmatprep.subr.mxu0 0.0
      %323 = vmatpush2.msra.mxu0 0.0
      %324 = vmatprep.subr.mxu0 0.0
      %325 = vmatpush2.msra.mxu0 0.0
      %326 = vmatprep.subr.mxu0 0.0
      %327 = vmatpush2.msra.mxu0 0.0
      %328 = vmatprep.subr.mxu0 0.0
      %329 = vmatpush2.msra.mxu0 0.0
      %330 = vmatprep.subr.mxu0 0.0
      %331 = vmatpush2.msra.mxu0 0.0
      %332 = vmatprep.subr.mxu0 0.0
      %333 = vmatpush2.msra.mxu0 0.0
      %334 = vmatprep.subr.mxu0 0.0
      %335 = vmatpush2.msra.mxu0 0.0
      %336 = vmatprep.subr.mxu0 0.0
      %337 = vmatpush2.msra.mxu0 0.0
      %338 = vmatprep.subr.mxu0 0.0
      %339 = vmatpush2.msra.mxu0 0.0
      %340 = vmatprep.subr.mxu0 0.0
      %341 = vmatpush2.msra.mxu0 0.0
      %342 = vmatprep.subr.mxu0 0.0
      %343 = vmatpush2.msra.mxu0 0.0
      %344 = vmatprep.subr.mxu0 0.0
      %345 = vmatpush2.msra.mxu0 0.0
      %346 = vmatprep.mubr.f32.mxu0 0.0
      %347 = vmatmul.mubr.f32.gmra.mxu0 %v280
      %v348 = vpop.f32.mrf.mxu0
      %v349 = vadd.f32 %v31, %v348
      %v350 = vpop.f32.mrf.mxu0
      %351 = vdwg.mxu0
      %v352 = vtanh.pop %v349
      %v353 = vmul.f32 %v195, 2.0
      %v354 = vadd.f32 %v114, %v353
      %v355 = vmul.f32 %v271, 2.0
      %v356 = vadd.f32 %v354, %v355
      %v357 = vadd.f32 %v356, %v352
      %359 = vset.pattern.permute.xlu0 0
      %360 = vperm.xlu0 %359, %v39
      %v361 = vpop.permute.xlu0 %360
      %v363 = vmul.f32 %v361, %v357
      %v364 = vadd.f32 %v37, %v363
      %vm365 = vcmask 60416
      %366 = vst.msk [vmem:[#allocation2] sm:$0xf] %vm365, %v364
    $region25: #{tpu_custom_call.1} parent=1 // pred_fallthru
      _
    %p367 = scmp.gt.s32.totalorder 0, 0
    // Predicated region
    $region26: #{tpu_custom_call.1} parent=1 // pred_check
      %p368 = pneg %p367
    $region27: #{tpu_custom_call.1} parent=1 // pred_check_branch
      %370 = sbr.rel (%p368) target = $region29
    $region28: #{tpu_custom_call.1} parent=1 // pred_region
      %v371 = vld [vmem:[#allocation2] sm:$0xf]
      %vm372 = vcmask 64512
      %v374 = vsel %vm372, %v371, 0
      %376 = vmatprep.subr.mxu0 0.0
      %377 = vmatpush1.msra.mxu0 0.0
      %378 = vmatprep.subr.mxu0 0.0
      %379 = vmatpush1.msra.mxu0 0.0
      %380 = vmatprep.subr.mxu0 0.0
      %381 = vmatpush1.msra.mxu0 0.0
      %382 = vmatprep.subr.mxu0 0.0
      %383 = vmatpush1.msra.mxu0 0.0
      %384 = vmatprep.subr.mxu0 0.0
      %385 = vmatpush1.msra.mxu0 0.0
      %386 = vmatprep.subr.mxu0 0.0
      %387 = vmatpush1.msra.mxu0 0.0
      %388 = vmatprep.subr.mxu0 0.0
      %389 = vmatpush1.msra.mxu0 0.0
      %390 = vmatprep.subr.mxu0 0.0
      %391 = vmatpush1.msra.mxu0 0.0
      %392 = vmatprep.subr.mxu0 0.0
      %393 = vmatpush1.msra.mxu0 0.0
      %394 = vmatprep.subr.mxu0 0.0
      %395 = vmatpush1.msra.mxu0 0.0
      %396 = vmatprep.subr.mxu0 0.0
      %397 = vmatpush1.msra.mxu0 0.0
      %398 = vmatprep.subr.mxu0 0.0
      %399 = vmatpush1.msra.mxu0 0.0
      %400 = vmatprep.subr.mxu0 0.0
      %401 = vmatpush1.msra.mxu0 0.0
      %402 = vmatprep.subr.mxu0 0.0
      %403 = vmatpush1.msra.mxu0 0.0
      %404 = vmatprep.subr.mxu0 0.0
      %405 = vmatpush1.msra.mxu0 0.0
      %406 = vmatprep.subr.mxu0 0.0
      %407 = vmatpush1.msra.mxu0 %v30
      %408 = vmatprep.subr.mxu0 0.0
      %409 = vmatpush2.msra.mxu0 0.0
      %410 = vmatprep.subr.mxu0 0.0
      %411 = vmatpush2.msra.mxu0 0.0
      %412 = vmatprep.subr.mxu0 0.0
      %413 = vmatpush2.msra.mxu0 0.0
      %414 = vmatprep.subr.mxu0 0.0
      %415 = vmatpush2.msra.mxu0 0.0
      %416 = vmatprep.subr.mxu0 0.0
      %417 = vmatpush2.msra.mxu0 0.0
      %418 = vmatprep.subr.mxu0 0.0
      %419 = vmatpush2.msra.mxu0 0.0
      %420 = vmatprep.subr.mxu0 0.0
      %421 = vmatpush2.msra.mxu0 0.0
      %422 = vmatprep.subr.mxu0 0.0
      %423 = vmatpush2.msra.mxu0 0.0
      %424 = vmatprep.subr.mxu0 0.0
      %425 = vmatpush2.msra.mxu0 0.0
      %426 = vmatprep.subr.mxu0 0.0
      %427 = vmatpush2.msra.mxu0 0.0
      %428 = vmatprep.subr.mxu0 0.0
      %429 = vmatpush2.msra.mxu0 0.0
      %430 = vmatprep.subr.mxu0 0.0
      %431 = vmatpush2.msra.mxu0 0.0
      %432 = vmatprep.subr.mxu0 0.0
      %433 = vmatpush2.msra.mxu0 0.0
      %434 = vmatprep.subr.mxu0 0.0
      %435 = vmatpush2.msra.mxu0 0.0
      %436 = vmatprep.subr.mxu0 0.0
      %437 = vmatpush2.msra.mxu0 0.0
      %438 = vmatprep.subr.mxu0 0.0
      %439 = vmatpush2.msra.mxu0 0.0
      %440 = vmatprep.mubr.f32.mxu0 0.0
      %441 = vmatmul.mubr.f32.gmra.mxu0 %v374
      %v442 = vpop.f32.mrf.mxu0
      %v443 = vadd.f32 %v31, %v442
      %v444 = vpop.f32.mrf.mxu0
      %445 = vdwg.mxu0
      %v446 = vtanh.pop %v443
      %448 = vset.pattern.permute.xlu0 0
      %449 = vperm.xlu0 %448, %v32
      %v450 = vpop.permute.xlu0 %449
      %v452 = vmul.f32 %v450, %v446
      %v453 = vadd.f32 %v371, %v452
      %vm454 = vcmask 60416
      %455 = vst.msk [vmem:[#allocation2] sm:$0xf] %vm454, %v453
    $region29: #{tpu_custom_call.1} parent=1 // pred_fallthru
      _
    %v456 = vld [vmem:[#allocation2] sm:$0xf]
    %vm457 = vcmask 60416
    %458 = vst.msk [vmem:[#allocation6] sm:$0xf] %vm457, %v456
    %s459 = scalar_lea.vmem %s2, 4
    %v460 = vld [vmem:[%s459] sm:$0xf]
    %s461 = scalar_lea.vmem %s1, 4
    %v462 = vld [vmem:[%s461] sm:$0xf]
    %vm463 = vcmask 64512
    %v465 = vsel %vm463, %v456, 0
    %467 = vmatprep.subr.mxu0 0.0
    %468 = vmatpush1.msra.mxu0 0.0
    %469 = vmatprep.subr.mxu0 0.0
    %470 = vmatpush1.msra.mxu0 0.0
    %471 = vmatprep.subr.mxu0 0.0
    %472 = vmatpush1.msra.mxu0 0.0
    %473 = vmatprep.subr.mxu0 0.0
    %474 = vmatpush1.msra.mxu0 0.0
    %475 = vmatprep.subr.mxu0 0.0
    %476 = vmatpush1.msra.mxu0 0.0
    %477 = vmatprep.subr.mxu0 0.0
    %478 = vmatpush1.msra.mxu0 0.0
    %479 = vmatprep.subr.mxu0 0.0
    %480 = vmatpush1.msra.mxu0 0.0
    %481 = vmatprep.subr.mxu0 0.0
    %482 = vmatpush1.msra.mxu0 0.0
    %483 = vmatprep.subr.mxu0 0.0
    %484 = vmatpush1.msra.mxu0 0.0
    %485 = vmatprep.subr.mxu0 0.0
    %486 = vmatpush1.msra.mxu0 0.0
    %487 = vmatprep.subr.mxu0 0.0
    %488 = vmatpush1.msra.mxu0 0.0
    %489 = vmatprep.subr.mxu0 0.0
    %490 = vmatpush1.msra.mxu0 0.0
    %491 = vmatprep.subr.mxu0 0.0
    %492 = vmatpush1.msra.mxu0 0.0
    %493 = vmatprep.subr.mxu0 0.0
    %494 = vmatpush1.msra.mxu0 0.0
    %495 = vmatprep.subr.mxu0 0.0
    %496 = vmatpush1.msra.mxu0 0.0
    %497 = vmatprep.subr.mxu0 0.0
    %498 = vmatpush1.msra.mxu0 %v30
    %499 = vmatprep.subr.mxu0 0.0
    %500 = vmatpush2.msra.mxu0 0.0
    %501 = vmatprep.subr.mxu0 0.0
    %502 = vmatpush2.msra.mxu0 0.0
    %503 = vmatprep.subr.mxu0 0.0
    %504 = vmatpush2.msra.mxu0 0.0
    %505 = vmatprep.subr.mxu0 0.0
    %506 = vmatpush2.msra.mxu0 0.0
    %507 = vmatprep.subr.mxu0 0.0
    %508 = vmatpush2.msra.mxu0 0.0
    %509 = vmatprep.subr.mxu0 0.0
    %510 = vmatpush2.msra.mxu0 0.0
    %511 = vmatprep.subr.mxu0 0.0
    %512 = vmatpush2.msra.mxu0 0.0
    %513 = vmatprep.subr.mxu0 0.0
    %514 = vmatpush2.msra.mxu0 0.0
    %515 = vmatprep.subr.mxu0 0.0
    %516 = vmatpush2.msra.mxu0 0.0
    %517 = vmatprep.subr.mxu0 0.0
    %518 = vmatpush2.msra.mxu0 0.0
    %519 = vmatprep.subr.mxu0 0.0
    %520 = vmatpush2.msra.mxu0 0.0
    %521 = vmatprep.subr.mxu0 0.0
    %522 = vmatpush2.msra.mxu0 0.0
    %523 = vmatprep.subr.mxu0 0.0
    %524 = vmatpush2.msra.mxu0 0.0
    %525 = vmatprep.subr.mxu0 0.0
    %526 = vmatpush2.msra.mxu0 0.0
    %527 = vmatprep.subr.mxu0 0.0
    %528 = vmatpush2.msra.mxu0 0.0
    %529 = vmatprep.subr.mxu0 0.0
    %530 = vmatpush2.msra.mxu0 0.0
    %531 = vmatprep.mubr.f32.mxu0 0.0
    %532 = vmatmul.mubr.f32.gmra.mxu0 %v465
    %v533 = vpop.f32.mrf.mxu0
    %v534 = vadd.f32 %v462, %v533
    %v535 = vpop.f32.mrf.mxu0
    %536 = vdwg.mxu0
    %v537 = vtanh.pop %v534
    %539 = vset.pattern.permute.xlu0 0
    %540 = vperm.xlu0 %539, %v460
    %v541 = vpop.permute.xlu0 %540
    %v543 = vmul.f32 %v541, %v537
    %v544 = vadd.f32 %v456, %v543
    %s545 = scalar_lea.vmem [#allocation6], 4
    %546 = vst.msk [vmem:[%s545] sm:$0xf] %vm457, %v544
    %s547 = scalar_lea.vmem %s2, 8
    %v548 = vld [vmem:[%s547] sm:$0xf]
    %s549 = scalar_lea.vmem %s1, 8
    %v550 = vld [vmem:[%s549] sm:$0xf]
    %v552 = vsel %vm463, %v544, 0
    %554 = vmatprep.subr.mxu0 0.0
    %555 = vmatpush1.msra.mxu0 0.0
    %556 = vmatprep.subr.mxu0 0.0
    %557 = vmatpush1.msra.mxu0 0.0
    %558 = vmatprep.subr.mxu0 0.0
    %559 = vmatpush1.msra.mxu0 0.0
    %560 = vmatprep.subr.mxu0 0.0
    %561 = vmatpush1.msra.mxu0 0.0
    %562 = vmatprep.subr.mxu0 0.0
    %563 = vmatpush1.msra.mxu0 0.0
    %564 = vmatprep.subr.mxu0 0.0
    %565 = vmatpush1.msra.mxu0 0.0
    %566 = vmatprep.subr.mxu0 0.0
    %567 = vmatpush1.msra.mxu0 0.0
    %568 = vmatprep.subr.mxu0 0.0
    %569 = vmatpush1.msra.mxu0 0.0
    %570 = vmatprep.subr.mxu0 0.0
    %571 = vmatpush1.msra.mxu0 0.0
    %572 = vmatprep.subr.mxu0 0.0
    %573 = vmatpush1.msra.mxu0 0.0
    %574 = vmatprep.subr.mxu0 0.0
    %575 = vmatpush1.msra.mxu0 0.0
    %576 = vmatprep.subr.mxu0 0.0
    %577 = vmatpush1.msra.mxu0 0.0
    %578 = vmatprep.subr.mxu0 0.0
    %579 = vmatpush1.msra.mxu0 0.0
    %580 = vmatprep.subr.mxu0 0.0
    %581 = vmatpush1.msra.mxu0 0.0
    %582 = vmatprep.subr.mxu0 0.0
    %583 = vmatpush1.msra.mxu0 0.0
    %584 = vmatprep.subr.mxu0 0.0
    %585 = vmatpush1.msra.mxu0 %v30
    %586 = vmatprep.subr.mxu0 0.0
    %587 = vmatpush2.msra.mxu0 0.0
    %588 = vmatprep.subr.mxu0 0.0
    %589 = vmatpush2.msra.mxu0 0.0
    %590 = vmatprep.subr.mxu0 0.0
    %591 = vmatpush2.msra.mxu0 0.0
    %592 = vmatprep.subr.mxu0 0.0
    %593 = vmatpush2.msra.mxu0 0.0
    %594 = vmatprep.subr.mxu0 0.0
    %595 = vmatpush2.msra.mxu0 0.0
    %596 = vmatprep.subr.mxu0 0.0
    %597 = vmatpush2.msra.mxu0 0.0
    %598 = vmatprep.subr.mxu0 0.0
    %599 = vmatpush2.msra.mxu0 0.0
    %600 = vmatprep.subr.mxu0 0.0
    %601 = vmatpush2.msra.mxu0 0.0
    %602 = vmatprep.subr.mxu0 0.0
    %603 = vmatpush2.msra.mxu0 0.0
    %604 = vmatprep.subr.mxu0 0.0
    %605 = vmatpush2.msra.mxu0 0.0
    %606 = vmatprep.subr.mxu0 0.0
    %607 = vmatpush2.msra.mxu0 0.0
    %608 = vmatprep.subr.mxu0 0.0
    %609 = vmatpush2.msra.mxu0 0.0
    %610 = vmatprep.subr.mxu0 0.0
    %611 = vmatpush2.msra.mxu0 0.0
    %612 = vmatprep.subr.mxu0 0.0
    %613 = vmatpush2.msra.mxu0 0.0
    %614 = vmatprep.subr.mxu0 0.0
    %615 = vmatpush2.msra.mxu0 0.0
    %616 = vmatprep.subr.mxu0 0.0
    %617 = vmatpush2.msra.mxu0 0.0
    %618 = vmatprep.mubr.f32.mxu0 0.0
    %619 = vmatmul.mubr.f32.gmra.mxu0 %v552
    %v620 = vpop.f32.mrf.mxu0
    %v621 = vadd.f32 %v550, %v620
    %v622 = vpop.f32.mrf.mxu0
    %623 = vdwg.mxu0
    %v624 = vtanh.pop %v621
    %626 = vset.pattern.permute.xlu0 0
    %627 = vperm.xlu0 %626, %v548
    %v628 = vpop.permute.xlu0 %627
    %v630 = vmul.f32 %v628, %v624
    %v631 = vadd.f32 %v544, %v630
    %s632 = scalar_lea.vmem [#allocation6], 8
    %633 = vst.msk [vmem:[%s632] sm:$0xf] %vm457, %v631
    %s634 = scalar_lea.vmem %s2, 12
    %v635 = vld [vmem:[%s634] sm:$0xf]
    %s636 = scalar_lea.vmem %s1, 12
    %v637 = vld [vmem:[%s636] sm:$0xf]
    %v639 = vsel %vm463, %v631, 0
    %641 = vmatprep.subr.mxu0 0.0
    %642 = vmatpush1.msra.mxu0 0.0
    %643 = vmatprep.subr.mxu0 0.0
    %644 = vmatpush1.msra.mxu0 0.0
    %645 = vmatprep.subr.mxu0 0.0
    %646 = vmatpush1.msra.mxu0 0.0
    %647 = vmatprep.subr.mxu0 0.0
    %648 = vmatpush1.msra.mxu0 0.0
    %649 = vmatprep.subr.mxu0 0.0
    %650 = vmatpush1.msra.mxu0 0.0
    %651 = vmatprep.subr.mxu0 0.0
    %652 = vmatpush1.msra.mxu0 0.0
    %653 = vmatprep.subr.mxu0 0.0
    %654 = vmatpush1.msra.mxu0 0.0
    %655 = vmatprep.subr.mxu0 0.0
    %656 = vmatpush1.msra.mxu0 0.0
    %657 = vmatprep.subr.mxu0 0.0
    %658 = vmatpush1.msra.mxu0 0.0
    %659 = vmatprep.subr.mxu0 0.0
    %660 = vmatpush1.msra.mxu0 0.0
    %661 = vmatprep.subr.mxu0 0.0
    %662 = vmatpush1.msra.mxu0 0.0
    %663 = vmatprep.subr.mxu0 0.0
    %664 = vmatpush1.msra.mxu0 0.0
    %665 = vmatprep.subr.mxu0 0.0
    %666 = vmatpush1.msra.mxu0 0.0
    %667 = vmatprep.subr.mxu0 0.0
    %668 = vmatpush1.msra.mxu0 0.0
    %669 = vmatprep.subr.mxu0 0.0
    %670 = vmatpush1.msra.mxu0 0.0
    %671 = vmatprep.subr.mxu0 0.0
    %672 = vmatpush1.msra.mxu0 %v30
    %673 = vmatprep.subr.mxu0 0.0
    %674 = vmatpush2.msra.mxu0 0.0
    %675 = vmatprep.subr.mxu0 0.0
    %676 = vmatpush2.msra.mxu0 0.0
    %677 = vmatprep.subr.mxu0 0.0
    %678 = vmatpush2.msra.mxu0 0.0
    %679 = vmatprep.subr.mxu0 0.0
    %680 = vmatpush2.msra.mxu0 0.0
    %681 = vmatprep.subr.mxu0 0.0
    %682 = vmatpush2.msra.mxu0 0.0
    %683 = vmatprep.subr.mxu0 0.0
    %684 = vmatpush2.msra.mxu0 0.0
    %685 = vmatprep.subr.mxu0 0.0
    %686 = vmatpush2.msra.mxu0 0.0
    %687 = vmatprep.subr.mxu0 0.0
    %688 = vmatpush2.msra.mxu0 0.0
    %689 = vmatprep.subr.mxu0 0.0
    %690 = vmatpush2.msra.mxu0 0.0
    %691 = vmatprep.subr.mxu0 0.0
    %692 = vmatpush2.msra.mxu0 0.0
    %693 = vmatprep.subr.mxu0 0.0
    %694 = vmatpush2.msra.mxu0 0.0
    %695 = vmatprep.subr.mxu0 0.0
    %696 = vmatpush2.msra.mxu0 0.0
    %697 = vmatprep.subr.mxu0 0.0
    %698 = vmatpush2.msra.mxu0 0.0
    %699 = vmatprep.subr.mxu0 0.0
    %700 = vmatpush2.msra.mxu0 0.0
    %701 = vmatprep.subr.mxu0 0.0
    %702 = vmatpush2.msra.mxu0 0.0
    %703 = vmatprep.subr.mxu0 0.0
    %704 = vmatpush2.msra.mxu0 0.0
    %705 = vmatprep.mubr.f32.mxu0 0.0
    %706 = vmatmul.mubr.f32.gmra.mxu0 %v639
    %v707 = vpop.f32.mrf.mxu0
    %v708 = vadd.f32 %v637, %v707
    %v709 = vpop.f32.mrf.mxu0
    %710 = vdwg.mxu0
    %v711 = vtanh.pop %v708
    %713 = vset.pattern.permute.xlu0 0
    %714 = vperm.xlu0 %713, %v635
    %v715 = vpop.permute.xlu0 %714
    %v717 = vmul.f32 %v715, %v711
    %v718 = vadd.f32 %v631, %v717
    %s719 = scalar_lea.vmem [#allocation6], 12
    %720 = vst.msk [vmem:[%s719] sm:$0xf] %vm457, %v718
    %s721 = scalar_lea.vmem %s2, 16
    %v722 = vld [vmem:[%s721] sm:$0xf]
    %s723 = scalar_lea.vmem %s1, 16
    %v724 = vld [vmem:[%s723] sm:$0xf]
    %v726 = vsel %vm463, %v718, 0
    %728 = vmatprep.subr.mxu0 0.0
    %729 = vmatpush1.msra.mxu0 0.0
    %730 = vmatprep.subr.mxu0 0.0
    %731 = vmatpush1.msra.mxu0 0.0
    %732 = vmatprep.subr.mxu0 0.0
    %733 = vmatpush1.msra.mxu0 0.0
    %734 = vmatprep.subr.mxu0 0.0
    %735 = vmatpush1.msra.mxu0 0.0
    %736 = vmatprep.subr.mxu0 0.0
    %737 = vmatpush1.msra.mxu0 0.0
    %738 = vmatprep.subr.mxu0 0.0
    %739 = vmatpush1.msra.mxu0 0.0
    %740 = vmatprep.subr.mxu0 0.0
    %741 = vmatpush1.msra.mxu0 0.0
    %742 = vmatprep.subr.mxu0 0.0
    %743 = vmatpush1.msra.mxu0 0.0
    %744 = vmatprep.subr.mxu0 0.0
    %745 = vmatpush1.msra.mxu0 0.0
    %746 = vmatprep.subr.mxu0 0.0
    %747 = vmatpush1.msra.mxu0 0.0
    %748 = vmatprep.subr.mxu0 0.0
    %749 = vmatpush1.msra.mxu0 0.0
    %750 = vmatprep.subr.mxu0 0.0
    %751 = vmatpush1.msra.mxu0 0.0
    %752 = vmatprep.subr.mxu0 0.0
    %753 = vmatpush1.msra.mxu0 0.0
    %754 = vmatprep.subr.mxu0 0.0
    %755 = vmatpush1.msra.mxu0 0.0
    %756 = vmatprep.subr.mxu0 0.0
    %757 = vmatpush1.msra.mxu0 0.0
    %758 = vmatprep.subr.mxu0 0.0
    %759 = vmatpush1.msra.mxu0 %v30
    %760 = vmatprep.subr.mxu0 0.0
    %761 = vmatpush2.msra.mxu0 0.0
    %762 = vmatprep.subr.mxu0 0.0
    %763 = vmatpush2.msra.mxu0 0.0
    %764 = vmatprep.subr.mxu0 0.0
    %765 = vmatpush2.msra.mxu0 0.0
    %766 = vmatprep.subr.mxu0 0.0
    %767 = vmatpush2.msra.mxu0 0.0
    %768 = vmatprep.subr.mxu0 0.0
    %769 = vmatpush2.msra.mxu0 0.0
    %770 = vmatprep.subr.mxu0 0.0
    %771 = vmatpush2.msra.mxu0 0.0
    %772 = vmatprep.subr.mxu0 0.0
    %773 = vmatpush2.msra.mxu0 0.0
    %774 = vmatprep.subr.mxu0 0.0
    %775 = vmatpush2.msra.mxu0 0.0
    %776 = vmatprep.subr.mxu0 0.0
    %777 = vmatpush2.msra.mxu0 0.0
    %778 = vmatprep.subr.mxu0 0.0
    %779 = vmatpush2.msra.mxu0 0.0
    %780 = vmatprep.subr.mxu0 0.0
    %781 = vmatpush2.msra.mxu0 0.0
    %782 = vmatprep.subr.mxu0 0.0
    %783 = vmatpush2.msra.mxu0 0.0
    %784 = vmatprep.subr.mxu0 0.0
    %785 = vmatpush2.msra.mxu0 0.0
    %786 = vmatprep.subr.mxu0 0.0
    %787 = vmatpush2.msra.mxu0 0.0
    %788 = vmatprep.subr.mxu0 0.0
    %789 = vmatpush2.msra.mxu0 0.0
    %790 = vmatprep.subr.mxu0 0.0
    %791 = vmatpush2.msra.mxu0 0.0
    %792 = vmatprep.mubr.f32.mxu0 0.0
    %793 = vmatmul.mubr.f32.gmra.mxu0 %v726
    %v794 = vpop.f32.mrf.mxu0
    %v795 = vadd.f32 %v724, %v794
    %v796 = vpop.f32.mrf.mxu0
    %797 = vdwg.mxu0
    %v798 = vtanh.pop %v795
    %800 = vset.pattern.permute.xlu0 0
    %801 = vperm.xlu0 %800, %v722
    %v802 = vpop.permute.xlu0 %801
    %v804 = vmul.f32 %v802, %v798
    %v805 = vadd.f32 %v718, %v804
    %s806 = scalar_lea.vmem [#allocation6], 16
    %807 = vst.msk [vmem:[%s806] sm:$0xf] %vm457, %v805
    %s808 = scalar_lea.vmem %s2, 20
    %v809 = vld [vmem:[%s808] sm:$0xf]
    %s810 = scalar_lea.vmem %s1, 20
    %v811 = vld [vmem:[%s810] sm:$0xf]
    %v813 = vsel %vm463, %v805, 0
    %815 = vmatprep.subr.mxu0 0.0
    %816 = vmatpush1.msra.mxu0 0.0
    %817 = vmatprep.subr.mxu0 0.0
    %818 = vmatpush1.msra.mxu0 0.0
    %819 = vmatprep.subr.mxu0 0.0
    %820 = vmatpush1.msra.mxu0 0.0
    %821 = vmatprep.subr.mxu0 0.0
    %822 = vmatpush1.msra.mxu0 0.0
    %823 = vmatprep.subr.mxu0 0.0
    %824 = vmatpush1.msra.mxu0 0.0
    %825 = vmatprep.subr.mxu0 0.0
    %826 = vmatpush1.msra.mxu0 0.0
    %827 = vmatprep.subr.mxu0 0.0
    %828 = vmatpush1.msra.mxu0 0.0
    %829 = vmatprep.subr.mxu0 0.0
    %830 = vmatpush1.msra.mxu0 0.0
    %831 = vmatprep.subr.mxu0 0.0
    %832 = vmatpush1.msra.mxu0 0.0
    %833 = vmatprep.subr.mxu0 0.0
    %834 = vmatpush1.msra.mxu0 0.0
    %835 = vmatprep.subr.mxu0 0.0
    %836 = vmatpush1.msra.mxu0 0.0
    %837 = vmatprep.subr.mxu0 0.0
    %838 = vmatpush1.msra.mxu0 0.0
    %839 = vmatprep.subr.mxu0 0.0
    %840 = vmatpush1.msra.mxu0 0.0
    %841 = vmatprep.subr.mxu0 0.0
    %842 = vmatpush1.msra.mxu0 0.0
    %843 = vmatprep.subr.mxu0 0.0
    %844 = vmatpush1.msra.mxu0 0.0
    %845 = vmatprep.subr.mxu0 0.0
    %846 = vmatpush1.msra.mxu0 %v30
    %847 = vmatprep.subr.mxu0 0.0
    %848 = vmatpush2.msra.mxu0 0.0
    %849 = vmatprep.subr.mxu0 0.0
    %850 = vmatpush2.msra.mxu0 0.0
    %851 = vmatprep.subr.mxu0 0.0
    %852 = vmatpush2.msra.mxu0 0.0
    %853 = vmatprep.subr.mxu0 0.0
    %854 = vmatpush2.msra.mxu0 0.0
    %855 = vmatprep.subr.mxu0 0.0
    %856 = vmatpush2.msra.mxu0 0.0
    %857 = vmatprep.subr.mxu0 0.0
    %858 = vmatpush2.msra.mxu0 0.0
    %859 = vmatprep.subr.mxu0 0.0
    %860 = vmatpush2.msra.mxu0 0.0
    %861 = vmatprep.subr.mxu0 0.0
    %862 = vmatpush2.msra.mxu0 0.0
    %863 = vmatprep.subr.mxu0 0.0
    %864 = vmatpush2.msra.mxu0 0.0
    %865 = vmatprep.subr.mxu0 0.0
    %866 = vmatpush2.msra.mxu0 0.0
    %867 = vmatprep.subr.mxu0 0.0
    %868 = vmatpush2.msra.mxu0 0.0
    %869 = vmatprep.subr.mxu0 0.0
    %870 = vmatpush2.msra.mxu0 0.0
    %871 = vmatprep.subr.mxu0 0.0
    %872 = vmatpush2.msra.mxu0 0.0
    %873 = vmatprep.subr.mxu0 0.0
    %874 = vmatpush2.msra.mxu0 0.0
    %875 = vmatprep.subr.mxu0 0.0
    %876 = vmatpush2.msra.mxu0 0.0
    %877 = vmatprep.subr.mxu0 0.0
    %878 = vmatpush2.msra.mxu0 0.0
    %879 = vmatprep.mubr.f32.mxu0 0.0
    %880 = vmatmul.mubr.f32.gmra.mxu0 %v813
    %v881 = vpop.f32.mrf.mxu0
    %v882 = vadd.f32 %v811, %v881
    %v883 = vpop.f32.mrf.mxu0
    %884 = vdwg.mxu0
    %v885 = vtanh.pop %v882
    %887 = vset.pattern.permute.xlu0 0
    %888 = vperm.xlu0 %887, %v809
    %v889 = vpop.permute.xlu0 %888
    %v891 = vmul.f32 %v889, %v885
    %v892 = vadd.f32 %v805, %v891
    %s893 = scalar_lea.vmem [#allocation6], 20
    %894 = vst.msk [vmem:[%s893] sm:$0xf] %vm457, %v892
    %s895 = scalar_lea.vmem %s2, 24
    %v896 = vld [vmem:[%s895] sm:$0xf]
    %s897 = scalar_lea.vmem %s1, 24
    %v898 = vld [vmem:[%s897] sm:$0xf]
    %v900 = vsel %vm463, %v892, 0
    %902 = vmatprep.subr.mxu0 0.0
    %903 = vmatpush1.msra.mxu0 0.0
    %904 = vmatprep.subr.mxu0 0.0
    %905 = vmatpush1.msra.mxu0 0.0
    %906 = vmatprep.subr.mxu0 0.0
    %907 = vmatpush1.msra.mxu0 0.0
    %908 = vmatprep.subr.mxu0 0.0
    %909 = vmatpush1.msra.mxu0 0.0
    %910 = vmatprep.subr.mxu0 0.0
    %911 = vmatpush1.msra.mxu0 0.0
    %912 = vmatprep.subr.mxu0 0.0
    %913 = vmatpush1.msra.mxu0 0.0
    %914 = vmatprep.subr.mxu0 0.0
    %915 = vmatpush1.msra.mxu0 0.0
    %916 = vmatprep.subr.mxu0 0.0
    %917 = vmatpush1.msra.mxu0 0.0
    %918 = vmatprep.subr.mxu0 0.0
    %919 = vmatpush1.msra.mxu0 0.0
    %920 = vmatprep.subr.mxu0 0.0
    %921 = vmatpush1.msra.mxu0 0.0
    %922 = vmatprep.subr.mxu0 0.0
    %923 = vmatpush1.msra.mxu0 0.0
    %924 = vmatprep.subr.mxu0 0.0
    %925 = vmatpush1.msra.mxu0 0.0
    %926 = vmatprep.subr.mxu0 0.0
    %927 = vmatpush1.msra.mxu0 0.0
    %928 = vmatprep.subr.mxu0 0.0
    %929 = vmatpush1.msra.mxu0 0.0
    %930 = vmatprep.subr.mxu0 0.0
    %931 = vmatpush1.msra.mxu0 0.0
    %932 = vmatprep.subr.mxu0 0.0
    %933 = vmatpush1.msra.mxu0 %v30
    %934 = vmatprep.subr.mxu0 0.0
    %935 = vmatpush2.msra.mxu0 0.0
    %936 = vmatprep.subr.mxu0 0.0
    %937 = vmatpush2.msra.mxu0 0.0
    %938 = vmatprep.subr.mxu0 0.0
    %939 = vmatpush2.msra.mxu0 0.0
    %940 = vmatprep.subr.mxu0 0.0
    %941 = vmatpush2.msra.mxu0 0.0
    %942 = vmatprep.subr.mxu0 0.0
    %943 = vmatpush2.msra.mxu0 0.0
    %944 = vmatprep.subr.mxu0 0.0
    %945 = vmatpush2.msra.mxu0 0.0
    %946 = vmatprep.subr.mxu0 0.0
    %947 = vmatpush2.msra.mxu0 0.0
    %948 = vmatprep.subr.mxu0 0.0
    %949 = vmatpush2.msra.mxu0 0.0
    %950 = vmatprep.subr.mxu0 0.0
    %951 = vmatpush2.msra.mxu0 0.0
    %952 = vmatprep.subr.mxu0 0.0
    %953 = vmatpush2.msra.mxu0 0.0
    %954 = vmatprep.subr.mxu0 0.0
    %955 = vmatpush2.msra.mxu0 0.0
    %956 = vmatprep.subr.mxu0 0.0
    %957 = vmatpush2.msra.mxu0 0.0
    %958 = vmatprep.subr.mxu0 0.0
    %959 = vmatpush2.msra.mxu0 0.0
    %960 = vmatprep.subr.mxu0 0.0
    %961 = vmatpush2.msra.mxu0 0.0
    %962 = vmatprep.subr.mxu0 0.0
    %963 = vmatpush2.msra.mxu0 0.0
    %964 = vmatprep.subr.mxu0 0.0
    %965 = vmatpush2.msra.mxu0 0.0
    %966 = vmatprep.mubr.f32.mxu0 0.0
    %967 = vmatmul.mubr.f32.gmra.mxu0 %v900
    %v968 = vpop.f32.mrf.mxu0
    %v969 = vadd.f32 %v898, %v968
    %v970 = vpop.f32.mrf.mxu0
    %971 = vdwg.mxu0
    %v972 = vtanh.pop %v969
    %974 = vset.pattern.permute.xlu0 0
    %975 = vperm.xlu0 %974, %v896
    %v976 = vpop.permute.xlu0 %975
    %v978 = vmul.f32 %v976, %v972
    %v979 = vadd.f32 %v892, %v978
    %s980 = scalar_lea.vmem [#allocation6], 24
    %981 = vst.msk [vmem:[%s980] sm:$0xf] %vm457, %v979
    %s982 = scalar_lea.vmem %s2, 28
    %v983 = vld [vmem:[%s982] sm:$0xf]
    %s984 = scalar_lea.vmem %s1, 28
    %v985 = vld [vmem:[%s984] sm:$0xf]
    %v987 = vsel %vm463, %v979, 0
    %989 = vmatprep.subr.mxu0 0.0
    %990 = vmatpush1.msra.mxu0 0.0
    %991 = vmatprep.subr.mxu0 0.0
    %992 = vmatpush1.msra.mxu0 0.0
    %993 = vmatprep.subr.mxu0 0.0
    %994 = vmatpush1.msra.mxu0 0.0
    %995 = vmatprep.subr.mxu0 0.0
    %996 = vmatpush1.msra.mxu0 0.0
    %997 = vmatprep.subr.mxu0 0.0
    %998 = vmatpush1.msra.mxu0 0.0
    %999 = vmatprep.subr.mxu0 0.0
    %1000 = vmatpush1.msra.mxu0 0.0
    %1001 = vmatprep.subr.mxu0 0.0
    %1002 = vmatpush1.msra.mxu0 0.0
    %1003 = vmatprep.subr.mxu0 0.0
    %1004 = vmatpush1.msra.mxu0 0.0
    %1005 = vmatprep.subr.mxu0 0.0
    %1006 = vmatpush1.msra.mxu0 0.0
    %1007 = vmatprep.subr.mxu0 0.0
    %1008 = vmatpush1.msra.mxu0 0.0
    %1009 = vmatprep.subr.mxu0 0.0
    %1010 = vmatpush1.msra.mxu0 0.0
    %1011 = vmatprep.subr.mxu0 0.0
    %1012 = vmatpush1.msra.mxu0 0.0
    %1013 = vmatprep.subr.mxu0 0.0
    %1014 = vmatpush1.msra.mxu0 0.0
    %1015 = vmatprep.subr.mxu0 0.0
    %1016 = vmatpush1.msra.mxu0 0.0
    %1017 = vmatprep.subr.mxu0 0.0
    %1018 = vmatpush1.msra.mxu0 0.0
    %1019 = vmatprep.subr.mxu0 0.0
    %1020 = vmatpush1.msra.mxu0 %v30
    %1021 = vmatprep.subr.mxu0 0.0
    %1022 = vmatpush2.msra.mxu0 0.0
    %1023 = vmatprep.subr.mxu0 0.0
    %1024 = vmatpush2.msra.mxu0 0.0
    %1025 = vmatprep.subr.mxu0 0.0
    %1026 = vmatpush2.msra.mxu0 0.0
    %1027 = vmatprep.subr.mxu0 0.0
    %1028 = vmatpush2.msra.mxu0 0.0
    %1029 = vmatprep.subr.mxu0 0.0
    %1030 = vmatpush2.msra.mxu0 0.0
    %1031 = vmatprep.subr.mxu0 0.0
    %1032 = vmatpush2.msra.mxu0 0.0
    %1033 = vmatprep.subr.mxu0 0.0
    %1034 = vmatpush2.msra.mxu0 0.0
    %1035 = vmatprep.subr.mxu0 0.0
    %1036 = vmatpush2.msra.mxu0 0.0
    %1037 = vmatprep.subr.mxu0 0.0
    %1038 = vmatpush2.msra.mxu0 0.0
    %1039 = vmatprep.subr.mxu0 0.0
    %1040 = vmatpush2.msra.mxu0 0.0
    %1041 = vmatprep.subr.mxu0 0.0
    %1042 = vmatpush2.msra.mxu0 0.0
    %1043 = vmatprep.subr.mxu0 0.0
    %1044 = vmatpush2.msra.mxu0 0.0
    %1045 = vmatprep.subr.mxu0 0.0
    %1046 = vmatpush2.msra.mxu0 0.0
    %1047 = vmatprep.subr.mxu0 0.0
    %1048 = vmatpush2.msra.mxu0 0.0
    %1049 = vmatprep.subr.mxu0 0.0
    %1050 = vmatpush2.msra.mxu0 0.0
    %1051 = vmatprep.subr.mxu0 0.0
    %1052 = vmatpush2.msra.mxu0 0.0
    %1053 = vmatprep.mubr.f32.mxu0 0.0
    %1054 = vmatmul.mubr.f32.gmra.mxu0 %v987
    %v1055 = vpop.f32.mrf.mxu0
    %v1056 = vadd.f32 %v985, %v1055
    %v1057 = vpop.f32.mrf.mxu0
    %1058 = vdwg.mxu0
    %v1059 = vtanh.pop %v1056
    %1061 = vset.pattern.permute.xlu0 0
    %1062 = vperm.xlu0 %1061, %v983
    %v1063 = vpop.permute.xlu0 %1062
    %v1065 = vmul.f32 %v1063, %v1059
    %v1066 = vadd.f32 %v979, %v1065
    %s1067 = scalar_lea.vmem [#allocation6], 28
    %1068 = vst.msk [vmem:[%s1067] sm:$0xf] %vm457, %v1066
    %1069 = vst.msk [vmem:[#allocation2] sm:$0xf] %vm457, %v1066
    // Predicated region
    $region30: #{tpu_custom_call.1} parent=1 // pred_check
      _
    $region31: #{tpu_custom_call.1} parent=1 // pred_check_branch
      %1071 = sbr.rel (0) target = $region33
    $region32: #{tpu_custom_call.1} parent=1 // pred_region
      %s1073 = ssub.s32 512, 512
      %1074 = vsyncadd [#allocation5], %s1073
      %s1075 = sshll.u32 [#allocation6], 4
      %s1076 = int_to_ptr.vmem [resolvable:$true] %s1075
      %1081 = dma.vmem_to_hbm [thread:$0]  %s1076, 512, %s4, [#allocation5], 64, 64, 4
    $region33: #{tpu_custom_call.1} parent=1 // pred_fallthru
      _
    // Predicated region
    $region34: #{tpu_custom_call.1} parent=1 // pred_check
      _
    $region35: #{tpu_custom_call.1} parent=1 // pred_check_branch
      %1083 = sbr.rel (0) target = $region37
    $region36: #{tpu_custom_call.1} parent=1 // pred_region
      %1084 = dma.done [#allocation5], 512
    $region37: #{tpu_custom_call.1} parent=1 // pred_fallthru
      _
    %1085 = vsyncpa [#allocation4], 1
    %1086 = vsyncpa [#allocation5], 1

</llo_original>
